<compile_context>
chip_gen: v6e
topology: v6e:2x2x1
jax: 0.10.0
libtpu: 0.0.40
codegen_flags: <defaults>
</compile_context>

<pallas_src>
import functools
import math

import jax
import jax.numpy as jnp
from jax import lax
from jax.experimental import pallas as pl
from jax.experimental.pallas import tpu as pltpu

ALPHA = 0.75
GAMMA = 2
EPSILON = 1e-4

LANES = 128
MAX_TILE_ROWS = 2048   # 2 inputs x 2 buffers x (2048*128*4B) = 4 MiB VMEM
NUM_CORES = 2          # leading "parallel" axis (v7x megacore); harmless on 1-TC chips


def _focal_kernel(pred_ref, targ_ref, acc_ref, *, alpha, gamma, epsilon,
                  n_valid, tile_rows, tiles_per_core):
    c = pl.program_id(0)   # core / partial-sum slot
    i = pl.program_id(1)   # row-tile index within this core (sequential)

    @pl.when(i == 0)
    def _init():
        acc_ref[...] = jnp.zeros_like(acc_ref)

    p = pred_ref[...].astype(jnp.float32)
    t = targ_ref[...].astype(jnp.float32)

    # Mask out padded / out-of-range elements by their global linear index.
    # (Uses the *logical* tile index so clamped ghost tiles contribute zero.)
    tile_idx = c * tiles_per_core + i
    base_off = tile_idx * (tile_rows * LANES)
    row_io = lax.broadcasted_iota(jnp.int32, (tile_rows, LANES), 0)
    lane_io = lax.broadcasted_iota(jnp.int32, (tile_rows, LANES), 1)
    lin = base_off + row_io * LANES + lane_io
    valid = lin < n_valid

    pos = jnp.logical_and(valid, t == 1.0)
    neg = jnp.logical_and(valid, t < 1.0)

    pc = jnp.clip(p, epsilon, 1.0 - epsilon)

    # Fused pos/neg branches: exactly one log per element.
    pow_base = jnp.where(pos, 1.0 - pc, pc)
    log_arg = jnp.where(pos, pc, 1.0 - pc)
    coef = jnp.where(pos, alpha, 1.0 - alpha)
    if gamma == 2:
        powed = pow_base * pow_base          # VPU, not EUP pow
    elif gamma == 1:
        powed = pow_base
    else:
        powed = jnp.power(pow_base, gamma)
    loss_elem = -coef * powed * jnp.log(log_arg)

    pos_loss = jnp.where(pos, loss_elem, 0.0)
    neg_loss = jnp.where(neg, loss_elem, 0.0)
    pos_cnt = jnp.where(pos, 1.0, 0.0)

    # Lane-parallel accumulation: fold (tile_rows, 128) -> (8, 128) with
    # elementwise vreg adds (free reshape), defer cross-lane reduce to JAX.
    def fold(x):
        return jnp.sum(x.reshape(tile_rows // 8, 8, LANES), axis=0)

    acc_ref[0] += fold(pos_loss)
    acc_ref[1] += fold(neg_loss)
    acc_ref[2] += fold(pos_cnt)


def focal_loss(prediction, target, alpha=ALPHA, gamma=GAMMA, epsilon=EPSILON):
    """Pallas TPU implementation of FocalLoss.forward. Returns a scalar f32."""
    assert prediction.shape == target.shape
    n = math.prod(prediction.shape)

    # Keep the native dtype (bf16 inputs halve HBM traffic); kernel upcasts.
    pred_flat = prediction.reshape(-1)
    targ_flat = target.reshape(-1)

    # Minimal padding only to a sublane/lane-aligned row count (<= 1023 elems,
    # usually zero). Pad values are masked in-kernel, so zeros are fine.
    chunk = 8 * LANES
    n_pad = (-n) % chunk
    if n_pad:
        pred_flat = jnp.pad(pred_flat, (0, n_pad))
        targ_flat = jnp.pad(targ_flat, (0, n_pad))

    rows = (n + n_pad) // LANES
    pred2d = pred_flat.reshape(rows, LANES)
    targ2d = targ_flat.reshape(rows, LANES)

    tile_rows = min(MAX_TILE_ROWS, rows)          # multiple of 8, <= rows
    tiles_total = pl.cdiv(rows, tile_rows)
    tiles_per_core = pl.cdiv(tiles_total, NUM_CORES)

    def in_map(c, i):
        # Clamp so the DMA stays in bounds; ghost tiles are fully masked.
        blk = jnp.minimum(c * tiles_per_core + i, tiles_total - 1)
        return (blk, 0)

    kernel = functools.partial(
        _focal_kernel, alpha=float(alpha), gamma=gamma, epsilon=float(epsilon),
        n_valid=n, tile_rows=tile_rows, tiles_per_core=tiles_per_core)

    acc = pl.pallas_call(
        kernel,
        out_shape=jax.ShapeDtypeStruct((NUM_CORES, 3, 8, LANES), jnp.float32),
        grid=(NUM_CORES, tiles_per_core),
        in_specs=[
            pl.BlockSpec((tile_rows, LANES), in_map),
            pl.BlockSpec((tile_rows, LANES), in_map),
        ],
        out_specs=pl.BlockSpec((None, 3, 8, LANES), lambda c, i: (c, 0, 0, 0)),
        compiler_params=pltpu.CompilerParams(
            dimension_semantics=("parallel", "arbitrary")),
    )(pred2d, targ2d)

    sums = acc.sum(axis=(0, 2, 3))                # tiny (3, 8, 128)-per-core reduce
    positive_loss, negative_loss, num_positive = sums[0], sums[1], sums[2]

    # Matches the PyTorch branch:
    #   if num_positive == 0: loss = negative_loss
    #   else:                 loss = (positive_loss + negative_loss) / num_positive
    loss = jnp.where(
        num_positive == 0.0,
        negative_loss,
        (positive_loss + negative_loss) /
        jnp.where(num_positive == 0.0, 1.0, num_positive),
    )
    return loss


def _focal_loss_ref(prediction, target, alpha=ALPHA, gamma=GAMMA,
                    epsilon=EPSILON):
    pos = (target == 1.0).astype(jnp.float32)
    neg = (target < 1.0).astype(jnp.float32)
    p = jnp.clip(prediction, epsilon, 1.0 - epsilon)
    pl_ = -alpha * jnp.power(1.0 - p, gamma) * jnp.log(p) * pos
    nl_ = -(1.0 - alpha) * jnp.power(p, gamma) * jnp.log(1.0 - p) * neg
    num_pos = pos.sum()
    return jnp.where(num_pos == 0.0, nl_.sum(),
                     (pl_.sum() + nl_.sum()) / jnp.where(num_pos == 0.0, 1.0,
                                                         num_pos))


if __name__ == "__main__":
    key = jax.random.PRNGKey(0)
    k1, k2 = jax.random.split(key)

    # NCHW, small shapes: batch=2, channels=4, spatial=16x16
    B, C, H, W = 2, 4, 16, 16
    prediction = jax.nn.sigmoid(
        jax.random.normal(k1, (B, C, H, W), jnp.float32))
    # Heatmap-style target: mostly values in [0,1), some exact 1.0 peaks.
    raw = jax.random.uniform(k2, (B, C, H, W), jnp.float32)
    target = jnp.where(raw > 0.95, 1.0, raw * 0.9)

    out = jax.block_until_ready(focal_loss(prediction, target))

    ref = _focal_loss_ref(prediction, target)
    assert jnp.allclose(out, ref, rtol=1e-5, atol=1e-5), (out, ref)

    print("KERNEL_OK")
</pallas_src>

<mosaic_0001>
module attributes {stable_mosaic.version = 11 : i64} {
  func.func @_focal_kernel(%arg0: i32, %arg1: i32, %arg2: memref<16x128xf32, #tpu.memory_space<vmem>>, %arg3: memref<16x128xf32, #tpu.memory_space<vmem>>, %arg4: memref<1x3x8x128xf32, #tpu.memory_space<vmem>>) attributes {dimension_semantics = [#tpu.dimension_semantics<parallel>, #tpu.dimension_semantics<arbitrary>], iteration_bounds = array<i64: 2, 1>, scalar_prefetch = 0 : i64, scratch_operands = 0 : i64, tpu.core_type = #tpu.core_type<tc>, window_params = [{transform_indices = @transform_0, window_bounds = array<i64: 16, 128>}, {transform_indices = @transform_1, window_bounds = array<i64: 16, 128>}, {transform_indices = @transform_2, window_bounds = array<i64: 1, 3, 8, 128>}]} {
    %c0_i32 = arith.constant 0 : i32
    %0 = arith.cmpi eq, %arg1, %c0_i32 : i32
    %1 = arith.extui %0 : i1 to i32
    %c0_i32_0 = arith.constant 0 : i32
    %2 = arith.cmpi ne, %1, %c0_i32_0 : i32
    scf.if %2 {
      %cst_42 = arith.constant 0.000000e+00 : f32
      %73 = vector.broadcast %cst_42 : f32 to vector<3x8x128xf32>
      %c0_43 = arith.constant 0 : index
      %c0_44 = arith.constant 0 : index
      %c0_45 = arith.constant 0 : index
      %c0_46 = arith.constant 0 : index
      %74 = vector.load %arg4[%c0_43, %c0_44, %c0_45, %c0_46] : memref<1x3x8x128xf32, #tpu.memory_space<vmem>>, vector<1x3x8x128xf32>
      %75 = vector.shape_cast %74 : vector<1x3x8x128xf32> to vector<3x8x128xf32>
      %76 = vector.shape_cast %73 : vector<3x8x128xf32> to vector<1x3x8x128xf32>
      tpu.vector_store %arg4[%c0_43, %c0_44, %c0_45, %c0_46], %76 {strides = array<i32>} : memref<1x3x8x128xf32, #tpu.memory_space<vmem>>, vector<1x3x8x128xf32>,
    } else {
    }
    %c0 = arith.constant 0 : index
    %c0_1 = arith.constant 0 : index
    %3 = vector.load %arg2[%c0, %c0_1] : memref<16x128xf32, #tpu.memory_space<vmem>>, vector<16x128xf32>
    %c0_2 = arith.constant 0 : index
    %c0_3 = arith.constant 0 : index
    %4 = vector.load %arg3[%c0_2, %c0_3] : memref<16x128xf32, #tpu.memory_space<vmem>>, vector<16x128xf32>
    %c1_i32 = arith.constant 1 : i32
    %5 = arith.muli %arg0, %c1_i32 : i32
    %6 = arith.addi %5, %arg1 : i32
    %c2048_i32 = arith.constant 2048 : i32
    %7 = arith.muli %6, %c2048_i32 : i32
    %8 = tpu.iota {dimensions = array<i32: 0>} : vector<16x128xi32>
    %9 = tpu.iota {dimensions = array<i32: 1>} : vector<16x128xi32>
    %c128_i32 = arith.constant 128 : i32
    %10 = vector.broadcast %c128_i32 : i32 to vector<16x128xi32>
    %11 = arith.muli %8, %10 : vector<16x128xi32>
    %12 = vector.broadcast %7 : i32 to vector<16x128xi32>
    %13 = arith.addi %12, %11 : vector<16x128xi32>
    %14 = arith.addi %13, %9 : vector<16x128xi32>
    %c2048_i32_4 = arith.constant 2048 : i32
    %15 = vector.broadcast %c2048_i32_4 : i32 to vector<16x128xi32>
    %16 = arith.cmpi slt, %14, %15 : vector<16x128xi32>
    %cst = arith.constant 1.000000e+00 : f32
    %17 = vector.broadcast %cst : f32 to vector<16x128xf32>
    %18 = arith.cmpf oeq, %4, %17 : vector<16x128xf32>
    %19 = arith.andi %16, %18 : vector<16x128xi1>
    %cst_5 = arith.constant 1.000000e+00 : f32
    %20 = vector.broadcast %cst_5 : f32 to vector<16x128xf32>
    %21 = arith.cmpf olt, %4, %20 : vector<16x128xf32>
    %22 = arith.andi %16, %21 : vector<16x128xi1>
    %cst_6 = arith.constant 9.99999974E-5 : f32
    %cst_7 = arith.constant 0.999899983 : f32
    %23 = vector.broadcast %cst_6 : f32 to vector<16x128xf32>
    %24 = arith.maximumf %23, %3 : vector<16x128xf32>
    %25 = vector.broadcast %cst_7 : f32 to vector<16x128xf32>
    %26 = arith.minimumf %25, %24 : vector<16x128xf32>
    %cst_8 = arith.constant 1.000000e+00 : f32
    %27 = vector.broadcast %cst_8 : f32 to vector<16x128xf32>
    %28 = arith.subf %27, %26 : vector<16x128xf32>
    %29 = arith.select %19, %28, %26 : vector<16x128xi1>, vector<16x128xf32>
    %cst_9 = arith.constant 1.000000e+00 : f32
    %30 = vector.broadcast %cst_9 : f32 to vector<16x128xf32>
    %31 = arith.subf %30, %26 : vector<16x128xf32>
    %32 = arith.select %19, %26, %31 : vector<16x128xi1>, vector<16x128xf32>
    %cst_10 = arith.constant 7.500000e-01 : f32
    %cst_11 = arith.constant 2.500000e-01 : f32
    %33 = vector.broadcast %cst_10 : f32 to vector<16x128xf32>
    %34 = vector.broadcast %cst_11 : f32 to vector<16x128xf32>
    %35 = arith.select %19, %33, %34 : vector<16x128xi1>, vector<16x128xf32>
    %36 = arith.mulf %29, %29 : vector<16x128xf32>
    %cst_12 = arith.constant 0.000000e+00 : f32
    %37 = vector.broadcast %cst_12 : f32 to vector<16x128xf32>
    %38 = arith.subf %37, %35 : vector<16x128xf32>
    %39 = arith.mulf %38, %36 : vector<16x128xf32>
    %40 = math.log %32 : vector<16x128xf32>
    %41 = arith.mulf %39, %40 : vector<16x128xf32>
    %cst_13 = arith.constant 0.000000e+00 : f32
    %42 = vector.broadcast %cst_13 : f32 to vector<16x128xf32>
    %43 = arith.select %19, %41, %42 : vector<16x128xi1>, vector<16x128xf32>
    %cst_14 = arith.constant 0.000000e+00 : f32
    %44 = vector.broadcast %cst_14 : f32 to vector<16x128xf32>
    %45 = arith.select %22, %41, %44 : vector<16x128xi1>, vector<16x128xf32>
    %cst_15 = arith.constant 1.000000e+00 : f32
    %cst_16 = arith.constant 0.000000e+00 : f32
    %46 = vector.broadcast %cst_15 : f32 to vector<16x128xf32>
    %47 = vector.broadcast %cst_16 : f32 to vector<16x128xf32>
    %48 = arith.select %19, %46, %47 : vector<16x128xi1>, vector<16x128xf32>
    %c0_17 = arith.constant 0 : index
    %c0_18 = arith.constant 0 : index
    %c0_19 = arith.constant 0 : index
    %c0_20 = arith.constant 0 : index
    %49 = vector.load %arg4[%c0_17, %c0_18, %c0_19, %c0_20] : memref<1x3x8x128xf32, #tpu.memory_space<vmem>>, vector<1x1x8x128xf32>
    %50 = vector.shape_cast %49 : vector<1x1x8x128xf32> to vector<8x128xf32>
    %51 = vector.shape_cast %43 : vector<16x128xf32> to vector<2x8x128xf32>
    %cst_21 = arith.constant dense<0.000000e+00> : vector<8x128xf32>
    %52 = vector.multi_reduction <add>, %51, %cst_21 [0] : vector<2x8x128xf32> to vector<8x128xf32>
    %53 = arith.addf %50, %52 : vector<8x128xf32>
    %c0_22 = arith.constant 0 : index
    %c0_23 = arith.constant 0 : index
    %c0_24 = arith.constant 0 : index
    %c0_25 = arith.constant 0 : index
    %54 = vector.load %arg4[%c0_22, %c0_23, %c0_24, %c0_25] : memref<1x3x8x128xf32, #tpu.memory_space<vmem>>, vector<1x1x8x128xf32>
    %55 = vector.shape_cast %54 : vector<1x1x8x128xf32> to vector<8x128xf32>
    %56 = vector.shape_cast %53 : vector<8x128xf32> to vector<1x1x8x128xf32>
    tpu.vector_store %arg4[%c0_22, %c0_23, %c0_24, %c0_25], %56 {strides = array<i32>} : memref<1x3x8x128xf32, #tpu.memory_space<vmem>>, vector<1x1x8x128xf32>,
    %c0_26 = arith.constant 0 : index
    %c1 = arith.constant 1 : index
    %c0_27 = arith.constant 0 : index
    %c0_28 = arith.constant 0 : index
    %57 = vector.load %arg4[%c0_26, %c1, %c0_27, %c0_28] : memref<1x3x8x128xf32, #tpu.memory_space<vmem>>, vector<1x1x8x128xf32>
    %58 = vector.shape_cast %57 : vector<1x1x8x128xf32> to vector<8x128xf32>
    %59 = vector.shape_cast %45 : vector<16x128xf32> to vector<2x8x128xf32>
    %cst_29 = arith.constant dense<0.000000e+00> : vector<8x128xf32>
    %60 = vector.multi_reduction <add>, %59, %cst_29 [0] : vector<2x8x128xf32> to vector<8x128xf32>
    %61 = arith.addf %58, %60 : vector<8x128xf32>
    %c0_30 = arith.constant 0 : index
    %c1_31 = arith.constant 1 : index
    %c0_32 = arith.constant 0 : index
    %c0_33 = arith.constant 0 : index
    %62 = vector.load %arg4[%c0_30, %c1_31, %c0_32, %c0_33] : memref<1x3x8x128xf32, #tpu.memory_space<vmem>>, vector<1x1x8x128xf32>
    %63 = vector.shape_cast %62 : vector<1x1x8x128xf32> to vector<8x128xf32>
    %64 = vector.shape_cast %61 : vector<8x128xf32> to vector<1x1x8x128xf32>
    tpu.vector_store %arg4[%c0_30, %c1_31, %c0_32, %c0_33], %64 {strides = array<i32>} : memref<1x3x8x128xf32, #tpu.memory_space<vmem>>, vector<1x1x8x128xf32>,
    %c0_34 = arith.constant 0 : index
    %c2 = arith.constant 2 : index
    %c0_35 = arith.constant 0 : index
    %c0_36 = arith.constant 0 : index
    %65 = vector.load %arg4[%c0_34, %c2, %c0_35, %c0_36] : memref<1x3x8x128xf32, #tpu.memory_space<vmem>>, vector<1x1x8x128xf32>
    %66 = vector.shape_cast %65 : vector<1x1x8x128xf32> to vector<8x128xf32>
    %67 = vector.shape_cast %48 : vector<16x128xf32> to vector<2x8x128xf32>
    %cst_37 = arith.constant dense<0.000000e+00> : vector<8x128xf32>
    %68 = vector.multi_reduction <add>, %67, %cst_37 [0] : vector<2x8x128xf32> to vector<8x128xf32>
    %69 = arith.addf %66, %68 : vector<8x128xf32>
    %c0_38 = arith.constant 0 : index
    %c2_39 = arith.constant 2 : index
    %c0_40 = arith.constant 0 : index
    %c0_41 = arith.constant 0 : index
    %70 = vector.load %arg4[%c0_38, %c2_39, %c0_40, %c0_41] : memref<1x3x8x128xf32, #tpu.memory_space<vmem>>, vector<1x1x8x128xf32>
    %71 = vector.shape_cast %70 : vector<1x1x8x128xf32> to vector<8x128xf32>
    %72 = vector.shape_cast %69 : vector<8x128xf32> to vector<1x1x8x128xf32>
    tpu.vector_store %arg4[%c0_38, %c2_39, %c0_40, %c0_41], %72 {strides = array<i32>} : memref<1x3x8x128xf32, #tpu.memory_space<vmem>>, vector<1x1x8x128xf32>,
    return
  }
  func.func @transform_0(%arg0: i32, %arg1: i32) -> (i32, i32) {
    %c1_i32 = arith.constant 1 : i32
    %0 = arith.muli %arg0, %c1_i32 : i32
    %1 = arith.addi %0, %arg1 : i32
    %c0_i32 = arith.constant 0 : i32
    %2 = arith.minsi %1, %c0_i32 : i32
    %c0_i32_0 = arith.constant 0 : i32
    %c0_i32_1 = arith.constant 0 : i32
    return %2, %c0_i32_0 : i32, i32
  }
  func.func @transform_1(%arg0: i32, %arg1: i32) -> (i32, i32) {
    %c1_i32 = arith.constant 1 : i32
    %0 = arith.muli %arg0, %c1_i32 : i32
    %1 = arith.addi %0, %arg1 : i32
    %c0_i32 = arith.constant 0 : i32
    %2 = arith.minsi %1, %c0_i32 : i32
    %c0_i32_0 = arith.constant 0 : i32
    %c0_i32_1 = arith.constant 0 : i32
    return %2, %c0_i32_0 : i32, i32
  }
  func.func @transform_2(%arg0: i32, %arg1: i32) -> (i32, i32, i32, i32) {
    %c0_i32 = arith.constant 0 : i32
    %c0_i32_0 = arith.constant 0 : i32
    %c0_i32_1 = arith.constant 0 : i32
    %c0_i32_2 = arith.constant 0 : i32
    return %arg0, %c0_i32, %c0_i32_0, %c0_i32_1 : i32, i32, i32, i32
  }
}

</mosaic_0001>

<llo_original>
// kernel: tpu_custom_call.1
$region0: #{tpu_custom_call.1}
  #allocation0 [shape = 'u32[]', space=smem, size = 0x4, offset = 0x4, fixed_abs, tag = 'smem constant byte address 0x4 - core index']
  #allocation1 [shape = 'u32[144,128]{1,0:T(1,128)}', space=vmem, size = 0x12000, scoped, tag = 'internal scratch']
  %s0 = inlined_call_operand.hbm [shape: f32[16,128], index: 0, kind: input, shape index: {}]
  %s1 = inlined_call_operand.hbm [shape: f32[16,128], index: 1, kind: input, shape index: {}]
  %s2 = inlined_call_operand.hbm [shape: f32[2,3,8,128], index: 2, kind: output, shape index: {}]
  %s3 = sld [smem:[#allocation0]]
  $region53: #{tpu_custom_call.1} parent=0
    _
  %s5 = ssub.s32 1, %s3
  %s6 = scalar_select 0, %s5, %s3
  $region1: #{tpu_custom_call.1} parent=0
    #allocation2 [shape = 'u8[16384]{0}', space=vmem, size = 0x4000, scoped, tag = 'input window, operand 0']
    #allocation3 [shape = 's32[2]{0}', space=sflag, size = 0x8, scoped, tag = 'scoped memory for tpu_custom_call.1']
    #allocation4 [shape = 's32[2]{0}', space=sflag, size = 0x8, scoped, tag = 'scoped memory for tpu_custom_call.1']
    #allocation5 [shape = 'u8[16384]{0}', space=vmem, size = 0x4000, scoped, tag = 'input window, operand 1']
    #allocation6 [shape = 's32[2]{0}', space=sflag, size = 0x8, scoped, tag = 'scoped memory for tpu_custom_call.1']
    #allocation7 [shape = 'u8[24576]{0}', space=vmem, size = 0x6000, scoped, tag = 'output window, operand 0']
    %7 = vsyncpa [#allocation3], 0
    %s8 = scalar_lea.sflag [#allocation3], 1
    %9 = vsyncpa %s8, 0
    %10 = vsyncpa [#allocation6], 0
    %s11 = scalar_lea.sflag [#allocation6], 1
    %12 = vsyncpa %s11, 0
    %13 = vsyncpa [#allocation4], 0
    %s14 = scalar_lea.sflag [#allocation4], 1
    %15 = vsyncpa %s14, 0
    loop: start=0, step=1, limit=4
    $region2: #{tpu_custom_call.1} parent=1 // loop_pre_header
      _
    $region3: #{tpu_custom_call.1} parent=1 // loop_header
      %s17 = sphi 0, %s21
      %p18 = scmp.ge.s32.totalorder %s17, 4
      %s24 = sphi 0, %s36
      %s25 = sphi 0, %s32
      %s26 = sphi 0, %s24
      %s27 = sphi 0, %s25
      %s28 = sphi 0, %s26
      %s29 = sphi 0, %s27
      %s45 = sphi 0, %s47
      %s48 = sphi 0, %s45
      %s49 = sphi 0, %s48
      %s65 = sphi 0, %s49
      %s77 = sphi 0, %s79
      %s80 = sphi 0, %s77
      %s81 = sphi 0, %s80
      %s97 = sphi 0, %s81
      %s103 = sphi 0, %s105
      %s106 = sphi 0, %s103
      %s107 = sphi 0, %s106
      %s123 = sphi 0, %s107
    $region4: #{tpu_custom_call.1} parent=1 // loop_header_branch
      %20 = sbr.rel (%p18) target = $region8
    $region5: #{tpu_custom_call.1} parent=1 // loop_body
      %s22 = ssub.s32 %s17, 1
      %s23 = ssub.s32 %s17, 2
      %s30 = sadd.s32 1, %s25
      %p31 = scmp.ge.s32.totalorder %s30, 1
      %s32 = scalar_select %p31, 0, %s30
      %s33 = sadd.s32 1, %s24
      %s34 = scalar_select %p31, %s33, %s24
      %p35 = scmp.ge.s32.totalorder %s34, 2
      %s36 = scalar_select %p35, 0, %s34
      %s37 = sadd.s32 %s24, %s25
      %p38 = scmp.lt.s32.totalorder %s37, 0
      %s39 = scalar_select %p38, %s37, 0
      %s40 = sadd.s32 %s36, %s32
      %p41 = scmp.lt.s32.totalorder %s40, 0
      %s42 = scalar_select %p41, %s40, 0
      %s43 = ssub.s32 %s39, %s42
      %p44 = scmp.eq.s32.totalorder %s43, 0
      %s46 = sadd.s32 %s45, 1
      %s47 = scalar_select %p44, %s45, %s46
      %p50 = pneg %p44
      %p51 = scmp.eq.s32.totalorder %s17, 1
      %p52 = por %p50, %p51
      %p53 = scmp.ne.s32.totalorder %s45, %s48
      %p54 = scmp.eq.s32.totalorder %s17, 0
      %p55 = por %p53, %p54
      %p56 = scmp.ne.s32.totalorder %s45, %s48
      %p57 = scmp.eq.s32.totalorder %s22, 1
      %p58 = por %p56, %p57
      %p59 = scmp.ne.s32.totalorder %s48, %s49
      %p60 = scmp.eq.s32.totalorder %s22, 0
      %p61 = por %p59, %p60
      %p62 = scmp.ne.s32.totalorder %s48, %s49
      %p63 = scmp.eq.s32.totalorder %s23, 1
      %p64 = por %p62, %p63
      %p66 = scmp.ne.s32.totalorder %s49, %s65
      %p67 = scmp.eq.s32.totalorder %s23, 0
      %p68 = por %p66, %p67
      %s69 = sadd.s32 %s24, %s25
      %p70 = scmp.lt.s32.totalorder %s69, 0
      %s71 = scalar_select %p70, %s69, 0
      %s72 = sadd.s32 %s36, %s32
      %p73 = scmp.lt.s32.totalorder %s72, 0
      %s74 = scalar_select %p73, %s72, 0
      %s75 = ssub.s32 %s71, %s74
      %p76 = scmp.eq.s32.totalorder %s75, 0
      %s78 = sadd.s32 %s77, 1
      %s79 = scalar_select %p76, %s77, %s78
      %p82 = pneg %p76
      %p83 = scmp.eq.s32.totalorder %s17, 1
      %p84 = por %p82, %p83
      %p85 = scmp.ne.s32.totalorder %s77, %s80
      %p86 = scmp.eq.s32.totalorder %s17, 0
      %p87 = por %p85, %p86
      %p88 = scmp.ne.s32.totalorder %s77, %s80
      %p89 = scmp.eq.s32.totalorder %s22, 1
      %p90 = por %p88, %p89
      %p91 = scmp.ne.s32.totalorder %s80, %s81
      %p92 = scmp.eq.s32.totalorder %s22, 0
      %p93 = por %p91, %p92
      %p94 = scmp.ne.s32.totalorder %s80, %s81
      %p95 = scmp.eq.s32.totalorder %s23, 1
      %p96 = por %p94, %p95
      %p98 = scmp.ne.s32.totalorder %s81, %s97
      %p99 = scmp.eq.s32.totalorder %s23, 0
      %p100 = por %p98, %p99
      %s101 = ssub.s32 %s24, %s36
      %p102 = scmp.eq.s32.totalorder %s101, 0
      %s104 = sadd.s32 %s103, 1
      %s105 = scalar_select %p102, %s103, %s104
      %p108 = pneg %p102
      %p109 = scmp.eq.s32.totalorder %s17, 1
      %p110 = por %p108, %p109
      %p111 = scmp.ne.s32.totalorder %s103, %s106
      %p112 = scmp.eq.s32.totalorder %s17, 0
      %p113 = por %p111, %p112
      %p114 = scmp.ne.s32.totalorder %s103, %s106
      %p115 = scmp.eq.s32.totalorder %s22, 1
      %p116 = por %p114, %p115
      %p117 = scmp.ne.s32.totalorder %s106, %s107
      %p118 = scmp.eq.s32.totalorder %s22, 0
      %p119 = por %p117, %p118
      %p120 = scmp.ne.s32.totalorder %s106, %s107
      %p121 = scmp.eq.s32.totalorder %s23, 1
      %p122 = por %p120, %p121
      %p124 = scmp.ne.s32.totalorder %s107, %s123
      %p125 = scmp.eq.s32.totalorder %s23, 0
      %p126 = por %p124, %p125
      %p127 = scmp.le.s32.totalorder 1, %s17
      %p128 = scmp.lt.s32.totalorder %s17, 3
      %p129 = pnand %p127, %p128
      %p130 = pneg %p129
      // Predicated region
      $region9: #{tpu_custom_call.1} parent=5 // pred_check
        _
      $region10: #{tpu_custom_call.1} parent=5 // pred_check_branch
        %132 = sbr.rel (%p129) target = $region12
      $region11: #{tpu_custom_call.1} parent=5 // pred_region
        %s133 = ssub.s32 %s17, 1
      $region12: #{tpu_custom_call.1} parent=5 // pred_fallthru
        _
      %p134 = scmp.lt.s32.totalorder %s17, 2
      // Predicated region
      $region13: #{tpu_custom_call.1} parent=5 // pred_check
        %p135 = pneg %p134
      $region14: #{tpu_custom_call.1} parent=5 // pred_check_branch
        %137 = sbr.rel (%p135) target = $region16
      $region15: #{tpu_custom_call.1} parent=5 // pred_region
        // Predicated region
        $region17: #{tpu_custom_call.1} parent=15 // pred_check
          %p138 = pneg %p55
        $region18: #{tpu_custom_call.1} parent=15 // pred_check_branch
          %140 = sbr.rel (%p138) target = $region20
        $region19: #{tpu_custom_call.1} parent=15 // pred_region
          %s141 = sand.u32 %s45, 1
          %s142 = scalar_lea.sflag [#allocation3], %s141
          %s143 = sand.u32 %s45, 1
          %s144 = smul.addr %s143, 16
          %s145 = scalar_lea.vmem [#allocation2], %s144
          %s146 = sadd.s32 %s24, %s25
          %p147 = scmp.lt.s32.totalorder %s146, 0
          %s148 = scalar_select %p147, %s146, 0
          %s149 = smul.u32 2, %s148
          %s151 = ssub.s32 256, 256
          %152 = vsyncadd %s142, %s151
          %s153 = smul.addr %s149, 128
          %s154 = scalar_lea.hbm %s0, %s153
          %s155 = sshll.u32 %s145, 4
          %s156 = int_to_ptr.vmem [resolvable:$true] %s155
          %161 = dma.hbm_to_vmem [thread:$0]  %s154, 256, %s156, %s142, 128, 128, 8
        $region20: #{tpu_custom_call.1} parent=15 // pred_fallthru
          _
        // Predicated region
        $region21: #{tpu_custom_call.1} parent=15 // pred_check
          %p162 = pneg %p87
        $region22: #{tpu_custom_call.1} parent=15 // pred_check_branch
          %164 = sbr.rel (%p162) target = $region24
        $region23: #{tpu_custom_call.1} parent=15 // pred_region
          %s165 = sand.u32 %s77, 1
          %s166 = scalar_lea.sflag [#allocation6], %s165
          %s167 = sand.u32 %s77, 1
          %s168 = smul.addr %s167, 16
          %s169 = scalar_lea.vmem [#allocation5], %s168
          %s170 = sadd.s32 %s24, %s25
          %p171 = scmp.lt.s32.totalorder %s170, 0
          %s172 = scalar_select %p171, %s170, 0
          %s173 = smul.u32 2, %s172
          %s175 = ssub.s32 256, 256
          %176 = vsyncadd %s166, %s175
          %s177 = smul.addr %s173, 128
          %s178 = scalar_lea.hbm %s1, %s177
          %s179 = sshll.u32 %s169, 4
          %s180 = int_to_ptr.vmem [resolvable:$true] %s179
          %185 = dma.hbm_to_vmem [thread:$0]  %s178, 256, %s180, %s166, 128, 128, 8
        $region24: #{tpu_custom_call.1} parent=15 // pred_fallthru
          _
      $region16: #{tpu_custom_call.1} parent=5 // pred_fallthru
        _
      %p186 = scmp.le.s32.totalorder 1, %s17
      %p187 = scmp.lt.s32.totalorder %s17, 3
      %p188 = pnand %p186, %p187
      %p189 = pneg %p188
      // Predicated region
      $region25: #{tpu_custom_call.1} parent=5 // pred_check
        _
      $region26: #{tpu_custom_call.1} parent=5 // pred_check_branch
        %191 = sbr.rel (%p188) target = $region28
      $region27: #{tpu_custom_call.1} parent=5 // pred_region
        %s192 = ssub.s32 %s17, 1
        %s193 = sand.u32 %s48, 1
        %s194 = scalar_lea.sflag [#allocation3], %s193
        %s195 = sand.u32 %s48, 1
        %s196 = smul.addr %s195, 16
        %s197 = scalar_lea.vmem [#allocation2], %s196
        // Predicated region
        $region29: #{tpu_custom_call.1} parent=27 // pred_check
          %p198 = pneg %p61
        $region30: #{tpu_custom_call.1} parent=27 // pred_check_branch
          %200 = sbr.rel (%p198) target = $region32
        $region31: #{tpu_custom_call.1} parent=27 // pred_region
          %201 = dma.done %s194, 256
        $region32: #{tpu_custom_call.1} parent=27 // pred_fallthru
          _
        %s202 = sand.u32 %s80, 1
        %s203 = scalar_lea.sflag [#allocation6], %s202
        %s204 = sand.u32 %s80, 1
        %s205 = smul.addr %s204, 16
        %s206 = scalar_lea.vmem [#allocation5], %s205
        // Predicated region
        $region33: #{tpu_custom_call.1} parent=27 // pred_check
          %p207 = pneg %p93
        $region34: #{tpu_custom_call.1} parent=27 // pred_check_branch
          %209 = sbr.rel (%p207) target = $region36
        $region35: #{tpu_custom_call.1} parent=27 // pred_region
          %210 = dma.done %s203, 256
        $region36: #{tpu_custom_call.1} parent=27 // pred_fallthru
          _
        %s211 = sand.u32 %s48, 1
        %s212 = scalar_lea.sflag [#allocation3], %s211
        %s213 = sand.u32 %s48, 1
        %s214 = smul.addr %s213, 16
        %s215 = scalar_lea.vmem [#allocation2], %s214
        %p216 = pneg %p61
        %p217 = pneg %p58
        %s218 = sand.u32 %s80, 1
        %s219 = scalar_lea.sflag [#allocation6], %s218
        %s220 = sand.u32 %s80, 1
        %s221 = smul.addr %s220, 16
        %s222 = scalar_lea.vmem [#allocation5], %s221
        %p223 = pneg %p93
        %p224 = pneg %p90
        %p225 = pneg %p119
        %p226 = pneg %p116
        %s227 = sand.u32 %s106, 1
        %s228 = scalar_lea.sflag [#allocation4], %s227
        %s229 = sand.u32 %s106, 1
        %s230 = smul.addr %s229, 24
        %s231 = scalar_lea.vmem [#allocation7], %s230
        %s232 = sadd.s32 %s26, %s27
        %p233 = scmp.lt.s32.totalorder %s232, 0
        %s234 = scalar_select %p233, %s232, 0
        %s235 = smul.u32 2, %s234
        %s236 = sadd.s32 %s26, %s27
        %p237 = scmp.lt.s32.totalorder %s236, 0
        %s238 = scalar_select %p237, %s236, 0
        %s239 = smul.u32 2, %s238
        %p240 = scmp.eq.s32.totalorder %s27, 0
        // Predicated region
        $region37: #{tpu_custom_call.1} parent=27 // pred_check
          %p241 = pneg %p240
        $region38: #{tpu_custom_call.1} parent=27 // pred_check_branch
          %243 = sbr.rel (%p241) target = $region40
        $region39: #{tpu_custom_call.1} parent=27 // pred_region
          %244 = vst [vmem:[%s231] sm:$0xff] 0.0
          %245 = vst [vmem:[%s231 + $0x8] sm:$0xff] 0.0
          %246 = vst [vmem:[%s231 + $0x10] sm:$0xff] 0.0
        $region40: #{tpu_custom_call.1} parent=27 // pred_fallthru
          _
        %v247 = vld [vmem:[%s197] sm:$0xff]
        %v248 = vld [vmem:[%s197 + $0x8] sm:$0xff]
        %v249 = vld [vmem:[%s206] sm:$0xff]
        %v250 = vld [vmem:[%s206 + $0x8] sm:$0xff]
        %s251 = sadd.s32 %s26, %s27
        %s252 = smul.u32 %s251, 2048
        %v253 = vlaneseq
        %v254 = vshrl.u32 %v253, 7
        %v255 = vadd.s32 %v254, 8
        %v256 = vlaneseq
        %v257 = vand.u32 %v256, 127
        %v258 = vmul.u32 %v254, 128
        %v259 = vmul.u32 %v255, 128
        %v260 = vstv %s252
        %v261 = vadd.s32 %v260, %v258
        %v262 = vadd.s32 %v260, %v259
        %v263 = vadd.s32 %v261, %v257
        %v264 = vadd.s32 %v262, %v257
        %vm265 = vcmp.lt.s32.totalorder %v263, 2048
        %vm266 = vcmp.lt.s32.totalorder %v264, 2048
        %vm267 = vcmp.eq.f32.partialorder %v249, 1.0
        %vm268 = vcmp.eq.f32.partialorder %v250, 1.0
        %vm269 = vmand %vm265, %vm267
        %vm270 = vmand %vm266, %vm268
        %vm271 = vcmp.lt.f32.partialorder %v249, 1.0
        %vm272 = vcmp.lt.f32.partialorder %v250, 1.0
        %vm273 = vmand %vm265, %vm271
        %vm274 = vmand %vm266, %vm272
        %v275 = vmax.f32 %v247, 0.0001
        %v276 = vmax.f32 %v248, 0.0001
        %v277 = vmin.f32 %v275, 0.9999
        %v278 = vmin.f32 %v276, 0.9999
        %v279 = vsub.f32 1.0, %v277
        %v280 = vsub.f32 1.0, %v278
        %v281 = vsel %vm269, %v279, %v277
        %v282 = vsel %vm270, %v280, %v278
        %v283 = vsel %vm269, %v277, %v279
        %v284 = vsel %vm270, %v278, %v280
        %v285 = vsel %vm269, 0.75, 0.25
        %v286 = vsel %vm270, 0.75, 0.25
        %v287 = vmul.f32 %v281, %v281
        %v288 = vmul.f32 %v282, %v282
        %v289 = vsub.f32 0.0, %v285
        %v290 = vsub.f32 0.0, %v286
        %v291 = vmul.f32 %v289, %v287
        %v292 = vmul.f32 %v290, %v288
        %v293 = vlog2.pop %v283
        %v294 = vmul.f32 %v293, 0.6931472
        %v295 = vlog2.pop %v284
        %v296 = vmul.f32 %v295, 0.6931472
        %v297 = vmul.f32 %v291, %v294
        %v298 = vmul.f32 %v292, %v296
        %v299 = vsel %vm269, %v297, 0.0
        %v300 = vsel %vm270, %v298, 0.0
        %v301 = vsel %vm273, %v297, 0.0
        %v302 = vsel %vm274, %v298, 0.0
        %v303 = vsel %vm269, 1.0, 0.0
        %v304 = vsel %vm270, 1.0, 0.0
        %v305 = vld [vmem:[%s231] sm:$0xff]
        %v306 = vadd.f32 %v299, %v300
        %v307 = vadd.f32 %v305, %v306
        %308 = vst [vmem:[%s231] sm:$0xff] %v307
        %s309 = scalar_lea.vmem %s231, 8 [#allocation7]
        %v310 = vld [vmem:[%s309] sm:$0xff]
        %v311 = vadd.f32 %v301, %v302
        %v312 = vadd.f32 %v310, %v311
        %313 = vst [vmem:[%s309] sm:$0xff] %v312
        %s314 = scalar_lea.vmem %s231, 16 [#allocation7]
        %v315 = vld [vmem:[%s314] sm:$0xff]
        %v316 = vadd.f32 %v303, %v304
        %v317 = vadd.f32 %v315, %v316
        %318 = vst [vmem:[%s314] sm:$0xff] %v317
        %s319 = sand.u32 %s106, 1
        %s320 = scalar_lea.sflag [#allocation4], %s319
        %s321 = sand.u32 %s106, 1
        %s322 = smul.addr %s321, 24
        %s323 = scalar_lea.vmem [#allocation7], %s322
        // Predicated region
        $region41: #{tpu_custom_call.1} parent=27 // pred_check
          %p324 = pneg %p116
        $region42: #{tpu_custom_call.1} parent=27 // pred_check_branch
          %326 = sbr.rel (%p324) target = $region44
        $region43: #{tpu_custom_call.1} parent=27 // pred_region
          %s328 = ssub.s32 384, 384
          %329 = vsyncadd %s320, %s328
          %s330 = smul.addr %s26, 3
          %s331 = smul.addr %s330, 128
          %s332 = scalar_lea.hbm %s2, %s331
          %s333 = sshll.u32 %s323, 4
          %s334 = int_to_ptr.vmem [resolvable:$true] %s333
          %339 = dma.vmem_to_hbm [thread:$0]  %s334, 384, %s332, %s320, 128, 128, 8
        $region44: #{tpu_custom_call.1} parent=27 // pred_fallthru
          _
      $region28: #{tpu_custom_call.1} parent=5 // pred_fallthru
        _
      %p340 = scmp.le.s32.totalorder 2, %s17
      // Predicated region
      $region45: #{tpu_custom_call.1} parent=5 // pred_check
        %p341 = pneg %p340
      $region46: #{tpu_custom_call.1} parent=5 // pred_check_branch
        %343 = sbr.rel (%p341) target = $region48
      $region47: #{tpu_custom_call.1} parent=5 // pred_region
        %s344 = ssub.s32 %s17, 2
        // Predicated region
        $region49: #{tpu_custom_call.1} parent=47 // pred_check
          %p345 = pneg %p122
        $region50: #{tpu_custom_call.1} parent=47 // pred_check_branch
          %347 = sbr.rel (%p345) target = $region52
        $region51: #{tpu_custom_call.1} parent=47 // pred_region
          %s348 = sand.u32 %s107, 1
          %s349 = scalar_lea.sflag [#allocation4], %s348
          %s350 = sand.u32 %s107, 1
          %s351 = smul.addr %s350, 24
          %s352 = scalar_lea.vmem [#allocation7], %s351
          %353 = dma.done %s349, 384
        $region52: #{tpu_custom_call.1} parent=47 // pred_fallthru
          _
      $region48: #{tpu_custom_call.1} parent=5 // pred_fallthru
        _
    $region6: #{tpu_custom_call.1} parent=1 // loop_footer
      %s21 = sadd.s32 1, %s17
    $region7: #{tpu_custom_call.1} parent=1 // loop_footer_branch
      %16 = sbr.rel target = $region3
    $region8: #{tpu_custom_call.1} parent=1 // loop_exit
      _
    %354 = vsyncpa [#allocation3], 1
    %s355 = scalar_lea.sflag [#allocation3], 1
    %356 = vsyncpa %s355, 1
    %357 = vsyncpa [#allocation6], 1
    %s358 = scalar_lea.sflag [#allocation6], 1
    %359 = vsyncpa %s358, 1
    %360 = vsyncpa [#allocation4], 1
    %s361 = scalar_lea.sflag [#allocation4], 1
    %362 = vsyncpa %s361, 1

</llo_original>
